<compile_context>
chip_gen: v7x
topology: tpu7x:2x2x1
jax: 0.10.0
libtpu: 0.0.40
codegen_flags: <defaults>
</compile_context>

<pallas_src>
import jax
import jax.numpy as jnp
from jax.experimental import pallas as pl
from jax.experimental.pallas import tpu as pltpu


LN_EPS = 1e-5  # torch.nn.LayerNorm default eps


def _phi3_kernel(x_ref,
                 w1_ref, b1_ref,      # Linear 1 with LN1 affine folded in
                 w2_ref, b2_ref,      # Linear 2 with LN2 affine folded in
                 o_ref):
    x = x_ref[...].astype(jnp.float32)

    # --- LayerNorm 1 (affine folded into w1/b1) ---
    mu = jnp.mean(x, axis=-1, keepdims=True)
    xc = x - mu
    var = jnp.mean(xc * xc, axis=-1, keepdims=True)
    xn = xc * jax.lax.rsqrt(var + LN_EPS)

    # (Dropout: identity in eval mode)

    # --- Linear 1 + ReLU (MXU) ---
    h = jnp.dot(xn, w1_ref[...], preferred_element_type=jnp.float32) + b1_ref[...]
    h = jnp.maximum(h, 0.0)

    # --- LayerNorm 2 (affine folded into w2/b2) ---
    mu2 = jnp.mean(h, axis=-1, keepdims=True)
    hc = h - mu2
    var2 = jnp.mean(hc * hc, axis=-1, keepdims=True)
    hn = hc * jax.lax.rsqrt(var2 + LN_EPS)

    # (Dropout: identity in eval mode)

    # --- Linear 2 ---
    out = jnp.dot(hn, w2_ref[...], preferred_element_type=jnp.float32) + b2_ref[...]
    o_ref[...] = out.astype(o_ref.dtype)


def _round_up(n, m):
    return ((n + m - 1) // m) * m


def rodt_forest_bagging_forward(F, params, *, tm=1024):
    """F: (batch, seq, H) float32. Returns (batch, seq, C)."""
    batch, seq, H = F.shape
    C = params["w2"].shape[1]
    M = batch * seq

    x2d = F.reshape(M, H)

    # --- Fold LayerNorm affine params into the linear layers (wrapper-side) ---
    #   (x_hat*g + be) @ W + b == x_hat @ (g[:,None]*W) + (be @ W + b)
    w1f = (params["ln1_g"].reshape(H, 1) * params["w1"]).astype(jnp.float32)
    b1f = (params["b1"] + params["ln1_b"] @ params["w1"]).astype(jnp.float32)
    w2f = (params["ln2_g"].reshape(H, 1) * params["w2"]).astype(jnp.float32)
    b2f = (params["b2"] + params["ln2_b"] @ params["w2"]).astype(jnp.float32)

    # --- Choose the row tile ---------------------------------------------------
    # Large tiles amortize the ~0.35us/step grid overhead; tiles are KiB-scale so
    # VMEM is never the constraint. Keep >=2 grid steps when possible so the
    # "parallel" axis can be sharded across v7x's two TensorCores.
    n_tiles = max(1, pl.cdiv(M, tm))
    if n_tiles == 1 and M >= 16:
        n_tiles = 2
    tm_eff = _round_up(pl.cdiv(M, n_tiles), 8)
    M_pad = n_tiles * tm_eff

    if M_pad != M:
        # Zero-pad rows; zeros are numerically safe through LN (var+eps > 0) and
        # the padded rows are sliced off below.
        x2d = jnp.pad(x2d, ((0, M_pad - M), (0, 0)))

    const = lambda i: (0, 0)  # params: same block every grid step (no re-DMA)

    cost = pl.CostEstimate(
        flops=2 * M_pad * (H * H + H * C),
        transcendentals=0,
        bytes_accessed=4 * (M_pad * (H + C) + H * H + H * C + H + C),
    )

    out2d = pl.pallas_call(
        _phi3_kernel,
        out_shape=jax.ShapeDtypeStruct((M_pad, C), F.dtype),
        grid_spec=pltpu.PrefetchScalarGridSpec(
            num_scalar_prefetch=0,
            grid=(n_tiles,),
            in_specs=[
                pl.BlockSpec((tm_eff, H), lambda i: (i, 0)),   # x rows
                pl.BlockSpec((H, H), const),                   # w1 (LN1 folded)
                pl.BlockSpec((1, H), const),                   # b1 (LN1 folded)
                pl.BlockSpec((H, C), const),                   # w2 (LN2 folded)
                pl.BlockSpec((1, C), const),                   # b2 (LN2 folded)
            ],
            out_specs=pl.BlockSpec((tm_eff, C), lambda i: (i, 0)),
        ),
        compiler_params=pltpu.CompilerParams(
            dimension_semantics=("parallel",)),
        cost_estimate=cost,
    )(x2d, w1f, b1f, w2f, b2f)

    # TODO(synk): at H=32/C=8 the activation path is lane-sparse (32 of 128
    # lanes); a further win would pack 4 row-groups per vreg with a segmented
    # LayerNorm reduction and a block-diagonal weight — not done here to keep
    # lowering simple and robust.
    return out2d[:M].reshape(batch, seq, C)


def init_params(key, n_hidden, n_class):
    """Deterministic synthetic parameters matching the PyTorch module shapes.

    nn.Linear stores weight as (out, in); we keep the (in, out) transpose for
    a row-major matmul inside the kernel. LayerNorm gamma/beta are randomized
    (deterministically) so the affine-folding path is actually exercised.
    """
    ks = jax.random.split(key, 8)
    scale1 = 1.0 / jnp.sqrt(n_hidden)
    return {
        "ln1_g": jax.random.normal(ks[0], (1, n_hidden), jnp.float32) * 0.1 + 1.0,
        "ln1_b": jax.random.normal(ks[1], (1, n_hidden), jnp.float32) * 0.1,
        "w1": jax.random.uniform(ks[2], (n_hidden, n_hidden), jnp.float32,
                                 -scale1, scale1),
        "b1": jax.random.uniform(ks[3], (1, n_hidden), jnp.float32,
                                 -scale1, scale1),
        "ln2_g": jax.random.normal(ks[4], (1, n_hidden), jnp.float32) * 0.1 + 1.0,
        "ln2_b": jax.random.normal(ks[5], (1, n_hidden), jnp.float32) * 0.1,
        "w2": jax.random.uniform(ks[6], (n_hidden, n_class), jnp.float32,
                                 -scale1, scale1),
        "b2": jax.random.uniform(ks[7], (1, n_class), jnp.float32,
                                 -scale1, scale1),
    }


def _reference(F, p):
    """Pure-JAX reference of the eval-mode PyTorch forward (no folding)."""
    def ln(x, g, b):
        mu = jnp.mean(x, axis=-1, keepdims=True)
        var = jnp.mean((x - mu) ** 2, axis=-1, keepdims=True)
        return (x - mu) / jnp.sqrt(var + LN_EPS) * g + b
    h = ln(F, p["ln1_g"][0], p["ln1_b"][0])
    h = h @ p["w1"] + p["b1"][0]
    h = jnp.maximum(h, 0.0)
    h = ln(h, p["ln2_g"][0], p["ln2_b"][0])
    return h @ p["w2"] + p["b2"][0]


if __name__ == "__main__":
    n_hidden, n_class = 32, 8
    batch, seq = 2, 8   # F: (batch, n_estimators, n_hidden)-style input

    key = jax.random.PRNGKey(0)
    kx, kp = jax.random.split(key)
    F = jax.random.normal(kx, (batch, seq, n_hidden), jnp.float32)
    params = init_params(kp, n_hidden, n_class)

    out = rodt_forest_bagging_forward(F, params)
    out = jax.block_until_ready(out)

    ref = _reference(F, params)
    assert out.shape == (batch, seq, n_class)
    assert jnp.allclose(out, ref, atol=1e-4, rtol=1e-4), "mismatch vs reference"

    # Also exercise a non-divisible row count + large-tile path.
    F2 = jax.random.normal(kx, (3, 7, n_hidden), jnp.float32)
    out2 = jax.block_until_ready(rodt_forest_bagging_forward(F2, params, tm=1024))
    ref2 = _reference(F2, params)
    assert out2.shape == (3, 7, n_class)
    assert jnp.allclose(out2, ref2, atol=1e-4, rtol=1e-4), "mismatch (padded path)"

    print("KERNEL_OK")
</pallas_src>

<mosaic_0001>
module attributes {stable_mosaic.version = 11 : i64} {
  func.func @_phi3_kernel(%arg0: i32, %arg1: memref<8x32xf32, #tpu.memory_space<vmem>>, %arg2: memref<32x32xf32, #tpu.memory_space<vmem>>, %arg3: memref<1x32xf32, #tpu.memory_space<vmem>>, %arg4: memref<32x8xf32, #tpu.memory_space<vmem>>, %arg5: memref<1x8xf32, #tpu.memory_space<vmem>>, %arg6: memref<8x8xf32, #tpu.memory_space<vmem>>) attributes {dimension_semantics = [#tpu.dimension_semantics<parallel>], iteration_bounds = array<i64: 2>, scalar_prefetch = 0 : i64, scratch_operands = 0 : i64, tpu.core_type = #tpu.core_type<tc>, window_params = [{transform_indices = @transform_0, window_bounds = array<i64: 8, 32>}, {pipeline_mode = #tpu.pipeline_mode<synchronous>, transform_indices = @transform_1, window_bounds = array<i64: 32, 32>}, {pipeline_mode = #tpu.pipeline_mode<synchronous>, transform_indices = @transform_2, window_bounds = array<i64: 1, 32>}, {pipeline_mode = #tpu.pipeline_mode<synchronous>, transform_indices = @transform_3, window_bounds = array<i64: 32, 8>}, {pipeline_mode = #tpu.pipeline_mode<synchronous>, transform_indices = @transform_4, window_bounds = array<i64: 1, 8>}, {transform_indices = @transform_5, window_bounds = array<i64: 8, 8>}]} {
    %c0 = arith.constant 0 : index
    %c0_0 = arith.constant 0 : index
    %0 = vector.load %arg1[%c0, %c0_0] : memref<8x32xf32, #tpu.memory_space<vmem>>, vector<8x32xf32>
    %cst = arith.constant dense<0.000000e+00> : vector<8xf32>
    %1 = vector.multi_reduction <add>, %0, %cst [1] : vector<8x32xf32> to vector<8xf32>
    %2 = vector.shape_cast %1 : vector<8xf32> to vector<8x1xf32>
    %cst_1 = arith.constant 3.200000e+01 : f32
    %3 = vector.broadcast %cst_1 : f32 to vector<8x1xf32>
    %4 = arith.divf %2, %3 : vector<8x1xf32>
    %5 = vector.broadcast %4 : vector<8x1xf32> to vector<8x32xf32>
    %6 = arith.subf %0, %5 : vector<8x32xf32>
    %7 = arith.mulf %6, %6 : vector<8x32xf32>
    %cst_2 = arith.constant dense<0.000000e+00> : vector<8xf32>
    %8 = vector.multi_reduction <add>, %7, %cst_2 [1] : vector<8x32xf32> to vector<8xf32>
    %9 = vector.shape_cast %8 : vector<8xf32> to vector<8x1xf32>
    %cst_3 = arith.constant 3.200000e+01 : f32
    %10 = vector.broadcast %cst_3 : f32 to vector<8x1xf32>
    %11 = arith.divf %9, %10 : vector<8x1xf32>
    %cst_4 = arith.constant 9.99999974E-6 : f32
    %12 = vector.broadcast %cst_4 : f32 to vector<8x1xf32>
    %13 = arith.addf %11, %12 : vector<8x1xf32>
    %14 = math.rsqrt %13 : vector<8x1xf32>
    %15 = vector.broadcast %14 : vector<8x1xf32> to vector<8x32xf32>
    %16 = arith.mulf %6, %15 : vector<8x32xf32>
    %c0_5 = arith.constant 0 : index
    %c0_6 = arith.constant 0 : index
    %17 = vector.load %arg2[%c0_5, %c0_6] : memref<32x32xf32, #tpu.memory_space<vmem>>, vector<32x32xf32>
    %cst_7 = arith.constant dense<0.000000e+00> : vector<8x32xf32>
    %18 = tpu.matmul %16, %17, %cst_7 {dimension_numbers = #tpu.dot_dimension_numbers<[1], [0], [0], [1], [0, 0, 1, 1], [], []>} : vector<8x32xf32>, vector<32x32xf32>, vector<8x32xf32> -> vector<8x32xf32>
    %c0_8 = arith.constant 0 : index
    %c0_9 = arith.constant 0 : index
    %19 = vector.load %arg3[%c0_8, %c0_9] : memref<1x32xf32, #tpu.memory_space<vmem>>, vector<1x32xf32>
    %20 = vector.broadcast %19 : vector<1x32xf32> to vector<8x32xf32>
    %21 = arith.addf %18, %20 : vector<8x32xf32>
    %cst_10 = arith.constant 0.000000e+00 : f32
    %22 = vector.broadcast %cst_10 : f32 to vector<8x32xf32>
    %23 = arith.maximumf %21, %22 : vector<8x32xf32>
    %cst_11 = arith.constant dense<0.000000e+00> : vector<8xf32>
    %24 = vector.multi_reduction <add>, %23, %cst_11 [1] : vector<8x32xf32> to vector<8xf32>
    %25 = vector.shape_cast %24 : vector<8xf32> to vector<8x1xf32>
    %cst_12 = arith.constant 3.200000e+01 : f32
    %26 = vector.broadcast %cst_12 : f32 to vector<8x1xf32>
    %27 = arith.divf %25, %26 : vector<8x1xf32>
    %28 = vector.broadcast %27 : vector<8x1xf32> to vector<8x32xf32>
    %29 = arith.subf %23, %28 : vector<8x32xf32>
    %30 = arith.mulf %29, %29 : vector<8x32xf32>
    %cst_13 = arith.constant dense<0.000000e+00> : vector<8xf32>
    %31 = vector.multi_reduction <add>, %30, %cst_13 [1] : vector<8x32xf32> to vector<8xf32>
    %32 = vector.shape_cast %31 : vector<8xf32> to vector<8x1xf32>
    %cst_14 = arith.constant 3.200000e+01 : f32
    %33 = vector.broadcast %cst_14 : f32 to vector<8x1xf32>
    %34 = arith.divf %32, %33 : vector<8x1xf32>
    %cst_15 = arith.constant 9.99999974E-6 : f32
    %35 = vector.broadcast %cst_15 : f32 to vector<8x1xf32>
    %36 = arith.addf %34, %35 : vector<8x1xf32>
    %37 = math.rsqrt %36 : vector<8x1xf32>
    %38 = vector.broadcast %37 : vector<8x1xf32> to vector<8x32xf32>
    %39 = arith.mulf %29, %38 : vector<8x32xf32>
    %c0_16 = arith.constant 0 : index
    %c0_17 = arith.constant 0 : index
    %40 = vector.load %arg4[%c0_16, %c0_17] : memref<32x8xf32, #tpu.memory_space<vmem>>, vector<32x8xf32>
    %cst_18 = arith.constant dense<0.000000e+00> : vector<8x8xf32>
    %41 = tpu.matmul %39, %40, %cst_18 {dimension_numbers = #tpu.dot_dimension_numbers<[1], [0], [0], [1], [0, 0, 1, 1], [], []>} : vector<8x32xf32>, vector<32x8xf32>, vector<8x8xf32> -> vector<8x8xf32>
    %c0_19 = arith.constant 0 : index
    %c0_20 = arith.constant 0 : index
    %42 = vector.load %arg5[%c0_19, %c0_20] : memref<1x8xf32, #tpu.memory_space<vmem>>, vector<1x8xf32>
    %43 = vector.broadcast %42 : vector<1x8xf32> to vector<8x8xf32>
    %44 = arith.addf %41, %43 : vector<8x8xf32>
    %c0_21 = arith.constant 0 : index
    %c0_22 = arith.constant 0 : index
    %45 = vector.load %arg6[%c0_21, %c0_22] : memref<8x8xf32, #tpu.memory_space<vmem>>, vector<8x8xf32>
    tpu.vector_store %arg6[%c0_21, %c0_22], %44 {strides = array<i32>} : memref<8x8xf32, #tpu.memory_space<vmem>>, vector<8x8xf32>,
    return
  }
  func.func @transform_0(%arg0: i32) -> (i32, i32) {
    %c0_i32 = arith.constant 0 : i32
    %c0_i32_0 = arith.constant 0 : i32
    return %arg0, %c0_i32 : i32, i32
  }
  func.func @transform_1(%arg0: i32) -> (i32, i32) {
    %c0_i32 = arith.constant 0 : i32
    %c0_i32_0 = arith.constant 0 : i32
    %c0_i32_1 = arith.constant 0 : i32
    return %c0_i32, %c0_i32_0 : i32, i32
  }
  func.func @transform_2(%arg0: i32) -> (i32, i32) {
    %c0_i32 = arith.constant 0 : i32
    %c0_i32_0 = arith.constant 0 : i32
    %c0_i32_1 = arith.constant 0 : i32
    return %c0_i32, %c0_i32_0 : i32, i32
  }
  func.func @transform_3(%arg0: i32) -> (i32, i32) {
    %c0_i32 = arith.constant 0 : i32
    %c0_i32_0 = arith.constant 0 : i32
    %c0_i32_1 = arith.constant 0 : i32
    return %c0_i32, %c0_i32_0 : i32, i32
  }
  func.func @transform_4(%arg0: i32) -> (i32, i32) {
    %c0_i32 = arith.constant 0 : i32
    %c0_i32_0 = arith.constant 0 : i32
    %c0_i32_1 = arith.constant 0 : i32
    return %c0_i32, %c0_i32_0 : i32, i32
  }
  func.func @transform_5(%arg0: i32) -> (i32, i32) {
    %c0_i32 = arith.constant 0 : i32
    %c0_i32_0 = arith.constant 0 : i32
    return %arg0, %c0_i32 : i32, i32
  }
}

</mosaic_0001>

<llo_original>
// kernel: tpu_custom_call.1
$region0: #{tpu_custom_call.1}
  #allocation0 [shape = 'u32[]', space=smem, size = 0x4, offset = 0x4, fixed_abs, tag = 'smem constant byte address 0x4 - core index']
  #allocation1 [shape = 'u32[144,128]{1,0:T(1,128)}', space=vmem, size = 0x12000, scoped, tag = 'internal scratch']
  %s0 = inlined_call_operand.hbm [shape: f32[16,32], index: 0, kind: input, shape index: {}]
  %s1 = inlined_call_operand.vmem [shape: f32[32,32], index: 1, kind: input, shape index: {}]
  %s2 = inlined_call_operand.vmem [shape: f32[1,32], index: 2, kind: input, shape index: {}]
  %s3 = inlined_call_operand.vmem [shape: f32[32,8], index: 3, kind: input, shape index: {}]
  %s4 = inlined_call_operand.vmem [shape: f32[1,8], index: 4, kind: input, shape index: {}]
  %s5 = inlined_call_operand.vmem [shape: f32[16,8], index: 5, kind: output, shape index: {}]
  %s6 = sld [smem:[#allocation0]]
  $region57: #{tpu_custom_call.1} parent=0
    _
  %s8 = ssub.s32 1, %s6
  %s9 = scalar_select 0, %s8, %s6
  $region1: #{tpu_custom_call.1} parent=0
    #allocation2 [shape = 'u8[8192]{0}', space=vmem, size = 0x2000, scoped, tag = 'input window, operand 0']
    #allocation3 [shape = 's32[2]{0}', space=sflag, size = 0x8, scoped, tag = 'scoped memory for tpu_custom_call.1']
    %10 = vsyncpa [#allocation3], 0
    %s11 = scalar_lea.sflag [#allocation3], 1
    %12 = vsyncpa %s11, 0
    loop: start=0, step=1, limit=4
    $region2: #{tpu_custom_call.1} parent=1 // loop_pre_header
      _
    $region3: #{tpu_custom_call.1} parent=1 // loop_header
      %s14 = sphi 0, %s18
      %p15 = scmp.ge.s32.totalorder %s14, 4
      %s24 = sphi 0, %s26
      %s27 = sphi 0, %s24
      %s28 = sphi 0, %s27
      %s44 = sphi 0, %s28
      %s48 = sphi 0, %s48
      %s50 = sphi 0, %s48
      %s51 = sphi 0, %s50
      %s65 = sphi 0, %s51
      %s69 = sphi 0, %s69
      %s71 = sphi 0, %s69
      %s72 = sphi 0, %s71
      %s86 = sphi 0, %s72
      %s90 = sphi 0, %s90
      %s92 = sphi 0, %s90
      %s93 = sphi 0, %s92
      %s107 = sphi 0, %s93
      %s111 = sphi 0, %s111
      %s113 = sphi 0, %s111
      %s114 = sphi 0, %s113
      %s128 = sphi 0, %s114
      %s134 = sphi 0, %s136
      %s137 = sphi 0, %s134
      %s138 = sphi 0, %s137
      %s154 = sphi 0, %s138
    $region4: #{tpu_custom_call.1} parent=1 // loop_header_branch
      %17 = sbr.rel (%p15) target = $region8
    $region5: #{tpu_custom_call.1} parent=1 // loop_body
      %s19 = ssub.s32 %s14, 1
      %s20 = ssub.s32 %s14, 2
      %s21 = sadd.s32 %s14, 1
      %s22 = ssub.s32 %s14, %s21
      %p23 = scmp.eq.s32.totalorder %s22, 0
      %s25 = sadd.s32 %s24, 1
      %s26 = scalar_select %p23, %s24, %s25
      %p29 = pneg %p23
      %p30 = scmp.eq.s32.totalorder %s14, 1
      %p31 = por %p29, %p30
      %p32 = scmp.ne.s32.totalorder %s24, %s27
      %p33 = scmp.eq.s32.totalorder %s14, 0
      %p34 = por %p32, %p33
      %p35 = scmp.ne.s32.totalorder %s24, %s27
      %p36 = scmp.eq.s32.totalorder %s19, 1
      %p37 = por %p35, %p36
      %p38 = scmp.ne.s32.totalorder %s27, %s28
      %p39 = scmp.eq.s32.totalorder %s19, 0
      %p40 = por %p38, %p39
      %p41 = scmp.ne.s32.totalorder %s27, %s28
      %p42 = scmp.eq.s32.totalorder %s20, 1
      %p43 = por %p41, %p42
      %p45 = scmp.ne.s32.totalorder %s28, %s44
      %p46 = scmp.eq.s32.totalorder %s20, 0
      %p47 = por %p45, %p46
      %s49 = sadd.s32 %s48, 1
      %p52 = scmp.eq.s32.totalorder %s14, 1
      %p53 = scmp.ne.s32.totalorder %s48, %s50
      %p54 = scmp.eq.s32.totalorder %s14, 0
      %p55 = por %p53, %p54
      %p56 = scmp.ne.s32.totalorder %s48, %s50
      %p57 = scmp.eq.s32.totalorder %s19, 1
      %p58 = por %p56, %p57
      %p59 = scmp.ne.s32.totalorder %s50, %s51
      %p60 = scmp.eq.s32.totalorder %s19, 0
      %p61 = por %p59, %p60
      %p62 = scmp.ne.s32.totalorder %s50, %s51
      %p63 = scmp.eq.s32.totalorder %s20, 1
      %p64 = por %p62, %p63
      %p66 = scmp.ne.s32.totalorder %s51, %s65
      %p67 = scmp.eq.s32.totalorder %s20, 0
      %p68 = por %p66, %p67
      %s70 = sadd.s32 %s69, 1
      %p73 = scmp.eq.s32.totalorder %s14, 1
      %p74 = scmp.ne.s32.totalorder %s69, %s71
      %p75 = scmp.eq.s32.totalorder %s14, 0
      %p76 = por %p74, %p75
      %p77 = scmp.ne.s32.totalorder %s69, %s71
      %p78 = scmp.eq.s32.totalorder %s19, 1
      %p79 = por %p77, %p78
      %p80 = scmp.ne.s32.totalorder %s71, %s72
      %p81 = scmp.eq.s32.totalorder %s19, 0
      %p82 = por %p80, %p81
      %p83 = scmp.ne.s32.totalorder %s71, %s72
      %p84 = scmp.eq.s32.totalorder %s20, 1
      %p85 = por %p83, %p84
      %p87 = scmp.ne.s32.totalorder %s72, %s86
      %p88 = scmp.eq.s32.totalorder %s20, 0
      %p89 = por %p87, %p88
      %s91 = sadd.s32 %s90, 1
      %p94 = scmp.eq.s32.totalorder %s14, 1
      %p95 = scmp.ne.s32.totalorder %s90, %s92
      %p96 = scmp.eq.s32.totalorder %s14, 0
      %p97 = por %p95, %p96
      %p98 = scmp.ne.s32.totalorder %s90, %s92
      %p99 = scmp.eq.s32.totalorder %s19, 1
      %p100 = por %p98, %p99
      %p101 = scmp.ne.s32.totalorder %s92, %s93
      %p102 = scmp.eq.s32.totalorder %s19, 0
      %p103 = por %p101, %p102
      %p104 = scmp.ne.s32.totalorder %s92, %s93
      %p105 = scmp.eq.s32.totalorder %s20, 1
      %p106 = por %p104, %p105
      %p108 = scmp.ne.s32.totalorder %s93, %s107
      %p109 = scmp.eq.s32.totalorder %s20, 0
      %p110 = por %p108, %p109
      %s112 = sadd.s32 %s111, 1
      %p115 = scmp.eq.s32.totalorder %s14, 1
      %p116 = scmp.ne.s32.totalorder %s111, %s113
      %p117 = scmp.eq.s32.totalorder %s14, 0
      %p118 = por %p116, %p117
      %p119 = scmp.ne.s32.totalorder %s111, %s113
      %p120 = scmp.eq.s32.totalorder %s19, 1
      %p121 = por %p119, %p120
      %p122 = scmp.ne.s32.totalorder %s113, %s114
      %p123 = scmp.eq.s32.totalorder %s19, 0
      %p124 = por %p122, %p123
      %p125 = scmp.ne.s32.totalorder %s113, %s114
      %p126 = scmp.eq.s32.totalorder %s20, 1
      %p127 = por %p125, %p126
      %p129 = scmp.ne.s32.totalorder %s114, %s128
      %p130 = scmp.eq.s32.totalorder %s20, 0
      %p131 = por %p129, %p130
      %s132 = ssub.s32 %s14, %s21
      %p133 = scmp.eq.s32.totalorder %s132, 0
      %s135 = sadd.s32 %s134, 1
      %s136 = scalar_select %p133, %s134, %s135
      %p139 = pneg %p133
      %p140 = scmp.eq.s32.totalorder %s14, 1
      %p141 = por %p139, %p140
      %p142 = scmp.ne.s32.totalorder %s134, %s137
      %p143 = scmp.eq.s32.totalorder %s14, 0
      %p144 = por %p142, %p143
      %p145 = scmp.ne.s32.totalorder %s134, %s137
      %p146 = scmp.eq.s32.totalorder %s19, 1
      %p147 = por %p145, %p146
      %p148 = scmp.ne.s32.totalorder %s137, %s138
      %p149 = scmp.eq.s32.totalorder %s19, 0
      %p150 = por %p148, %p149
      %p151 = scmp.ne.s32.totalorder %s137, %s138
      %p152 = scmp.eq.s32.totalorder %s20, 1
      %p153 = por %p151, %p152
      %p155 = scmp.ne.s32.totalorder %s138, %s154
      %p156 = scmp.eq.s32.totalorder %s20, 0
      %p157 = por %p155, %p156
      %p158 = scmp.le.s32.totalorder 1, %s14
      %p159 = scmp.lt.s32.totalorder %s14, 3
      %p160 = pnand %p158, %p159
      %p161 = pneg %p160
      // Predicated region
      $region9: #{tpu_custom_call.1} parent=5 // pred_check
        _
      $region10: #{tpu_custom_call.1} parent=5 // pred_check_branch
        %163 = sbr.rel (%p160) target = $region12
      $region11: #{tpu_custom_call.1} parent=5 // pred_region
        %s164 = ssub.s32 %s14, 1
        // Predicated region
        $region13: #{tpu_custom_call.1} parent=11 // pred_check
          %p165 = pneg %p61
        $region14: #{tpu_custom_call.1} parent=11 // pred_check_branch
          %167 = sbr.rel (%p165) target = $region16
        $region15: #{tpu_custom_call.1} parent=11 // pred_region
          _
        $region16: #{tpu_custom_call.1} parent=11 // pred_fallthru
          _
        // Predicated region
        $region17: #{tpu_custom_call.1} parent=11 // pred_check
          %p168 = pneg %p82
        $region18: #{tpu_custom_call.1} parent=11 // pred_check_branch
          %170 = sbr.rel (%p168) target = $region20
        $region19: #{tpu_custom_call.1} parent=11 // pred_region
          _
        $region20: #{tpu_custom_call.1} parent=11 // pred_fallthru
          _
        // Predicated region
        $region21: #{tpu_custom_call.1} parent=11 // pred_check
          %p171 = pneg %p103
        $region22: #{tpu_custom_call.1} parent=11 // pred_check_branch
          %173 = sbr.rel (%p171) target = $region24
        $region23: #{tpu_custom_call.1} parent=11 // pred_region
          _
        $region24: #{tpu_custom_call.1} parent=11 // pred_fallthru
          _
        // Predicated region
        $region25: #{tpu_custom_call.1} parent=11 // pred_check
          %p174 = pneg %p124
        $region26: #{tpu_custom_call.1} parent=11 // pred_check_branch
          %176 = sbr.rel (%p174) target = $region28
        $region27: #{tpu_custom_call.1} parent=11 // pred_region
          _
        $region28: #{tpu_custom_call.1} parent=11 // pred_fallthru
          _
      $region12: #{tpu_custom_call.1} parent=5 // pred_fallthru
        _
      %p177 = scmp.lt.s32.totalorder %s14, 2
      // Predicated region
      $region29: #{tpu_custom_call.1} parent=5 // pred_check
        %p178 = pneg %p177
      $region30: #{tpu_custom_call.1} parent=5 // pred_check_branch
        %180 = sbr.rel (%p178) target = $region32
      $region31: #{tpu_custom_call.1} parent=5 // pred_region
        // Predicated region
        $region33: #{tpu_custom_call.1} parent=31 // pred_check
          %p181 = pneg %p34
        $region34: #{tpu_custom_call.1} parent=31 // pred_check_branch
          %183 = sbr.rel (%p181) target = $region36
        $region35: #{tpu_custom_call.1} parent=31 // pred_region
          %s184 = sand.u32 %s24, 1
          %s185 = scalar_lea.sflag [#allocation3], %s184
          %s186 = sand.u32 %s24, 1
          %s187 = smul.addr %s186, 8
          %s188 = scalar_lea.vmem [#allocation2], %s187
          %s190 = ssub.s32 128, 128
          %191 = vsyncadd %s185, %s190
          %s192 = smul.addr %s14, 128
          %s193 = scalar_lea.hbm %s0, %s192
          %s195 = sshll.u32 %s188, 4
          %s196 = int_to_ptr.vmem [resolvable:$true] %s195
          %198 = dma.hbm_to_vmem [thread:$0]  %s193, 128, %s196, %s185
        $region36: #{tpu_custom_call.1} parent=31 // pred_fallthru
          _
      $region32: #{tpu_custom_call.1} parent=5 // pred_fallthru
        _
      %p199 = scmp.le.s32.totalorder 1, %s14
      %p200 = scmp.lt.s32.totalorder %s14, 3
      %p201 = pnand %p199, %p200
      %p202 = pneg %p201
      // Predicated region
      $region37: #{tpu_custom_call.1} parent=5 // pred_check
        _
      $region38: #{tpu_custom_call.1} parent=5 // pred_check_branch
        %204 = sbr.rel (%p201) target = $region40
      $region39: #{tpu_custom_call.1} parent=5 // pred_region
        %s205 = ssub.s32 %s14, 1
        %s206 = sand.u32 %s27, 1
        %s207 = scalar_lea.sflag [#allocation3], %s206
        %s208 = sand.u32 %s27, 1
        %s209 = smul.addr %s208, 8
        %s210 = scalar_lea.vmem [#allocation2], %s209
        // Predicated region
        $region41: #{tpu_custom_call.1} parent=39 // pred_check
          %p211 = pneg %p40
        $region42: #{tpu_custom_call.1} parent=39 // pred_check_branch
          %213 = sbr.rel (%p211) target = $region44
        $region43: #{tpu_custom_call.1} parent=39 // pred_region
          %214 = dma.done %s207, 128
        $region44: #{tpu_custom_call.1} parent=39 // pred_fallthru
          _
        %s215 = sand.u32 %s27, 1
        %s216 = scalar_lea.sflag [#allocation3], %s215
        %s217 = sand.u32 %s27, 1
        %s218 = smul.addr %s217, 8
        %s219 = scalar_lea.vmem [#allocation2], %s218
        %p220 = pneg %p40
        %p221 = pneg %p37
        %p222 = pneg %p61
        %p223 = pneg %p58
        %p224 = pneg %p82
        %p225 = pneg %p79
        %p226 = pneg %p103
        %p227 = pneg %p100
        %p228 = pneg %p124
        %p229 = pneg %p121
        %p230 = pneg %p150
        %p231 = pneg %p147
        %p232 = scmp.lt.s32.totalorder %s19, 1
        %s233 = scalar_select %p232, %s19, 1
        %s234 = smul.addr %s233, 8
        %s235 = scalar_lea.vmem %s5, %s234
        %p236 = scmp.lt.s32.totalorder %s19, 1
        %s237 = scalar_select %p236, %s19, 1
        %s238 = smul.addr %s237, 8
        %s239 = scalar_lea.vmem %s5, %s238
        %v240 = vld [vmem:[%s210] sm:$0xff]
        %vm241 = vcmask 261120
        %v242 = vsel %vm241, %v240, 0.0
        %243 = vadd.xlane.f32.xlu0 %v242
        %v244 = vpop.xlane.xlu0 %243
        %v245 = vrcp.pop 32.0
        %v246 = vmul.f32 %v244, %v245
        %v247 = vsub.f32 %v240, %v246
        %v248 = vmul.f32 %v247, %v247
        %v249 = vsel %vm241, %v248, 0.0
        %250 = vadd.xlane.f32.xlu0 %v249
        %v251 = vpop.xlane.xlu0 %250
        %v252 = vmul.f32 %v251, %v245
        %v253 = vadd.f32 %v252, 1e-05
        %v254 = vrsqrt.pop %v253
        %v255 = vmul.f32 %v247, %v254
        %v256 = vld [vmem:[%s1] sm:$0xff]
        %v257 = vld [vmem:[%s1 + $0x8] sm:$0xff]
        %v258 = vld [vmem:[%s1 + $0x10] sm:$0xff]
        %v259 = vld [vmem:[%s1 + $0x18] sm:$0xff]
        %v260 = vld [vmem:[%s2] sm:$0x1]
        %v262 = vlaneseq
        %v263 = vshrl.u32 %v262, 7
        %v264 = vsub.s32 0, %v263
        %v265 = vrot.slane %v260, %v264
        %v268 = vsel %vm241, %v255, 0
        %270 = vmatprep.subr.mxu0 0.0
        %271 = vmatpush1.msra.mxu0 %v256
        %272 = vmatprep.subr.mxu0 0.0
        %273 = vmatpush1.msra.mxu0 %v257
        %274 = vmatprep.subr.mxu0 0.0
        %275 = vmatpush1.msra.mxu0 %v258
        %276 = vmatprep.subr.mxu0 0.0
        %277 = vmatpush1.msra.mxu0 %v259
        %278 = vmatprep.subr.mxu0 0.0
        %279 = vmatpush1.msra.mxu0 0.0
        %280 = vmatprep.subr.mxu0 0.0
        %281 = vmatpush1.msra.mxu0 0.0
        %282 = vmatprep.subr.mxu0 0.0
        %283 = vmatpush1.msra.mxu0 0.0
        %284 = vmatprep.subr.mxu0 0.0
        %285 = vmatpush1.msra.mxu0 0.0
        %286 = vmatprep.subr.mxu0 0.0
        %287 = vmatpush1.msra.mxu0 0.0
        %288 = vmatprep.subr.mxu0 0.0
        %289 = vmatpush1.msra.mxu0 0.0
        %290 = vmatprep.subr.mxu0 0.0
        %291 = vmatpush1.msra.mxu0 0.0
        %292 = vmatprep.subr.mxu0 0.0
        %293 = vmatpush1.msra.mxu0 0.0
        %294 = vmatprep.subr.mxu0 0.0
        %295 = vmatpush1.msra.mxu0 0.0
        %296 = vmatprep.subr.mxu0 0.0
        %297 = vmatpush1.msra.mxu0 0.0
        %298 = vmatprep.subr.mxu0 0.0
        %299 = vmatpush1.msra.mxu0 0.0
        %300 = vmatprep.subr.mxu0 0.0
        %301 = vmatpush1.msra.mxu0 0.0
        %302 = vmatprep.subr.mxu0 0.0
        %303 = vmatpush1.msra.mxu0 0.0
        %304 = vmatprep.subr.mxu0 0.0
        %305 = vmatpush1.msra.mxu0 0.0
        %306 = vmatprep.subr.mxu0 0.0
        %307 = vmatpush1.msra.mxu0 0.0
        %308 = vmatprep.subr.mxu0 0.0
        %309 = vmatpush1.msra.mxu0 0.0
        %310 = vmatprep.subr.mxu0 0.0
        %311 = vmatpush1.msra.mxu0 0.0
        %312 = vmatprep.subr.mxu0 0.0
        %313 = vmatpush1.msra.mxu0 0.0
        %314 = vmatprep.subr.mxu0 0.0
        %315 = vmatpush1.msra.mxu0 0.0
        %316 = vmatprep.subr.mxu0 0.0
        %317 = vmatpush1.msra.mxu0 0.0
        %318 = vmatprep.subr.mxu0 0.0
        %319 = vmatpush1.msra.mxu0 0.0
        %320 = vmatprep.subr.mxu0 0.0
        %321 = vmatpush1.msra.mxu0 0.0
        %322 = vmatprep.subr.mxu0 0.0
        %323 = vmatpush1.msra.mxu0 0.0
        %324 = vmatprep.subr.mxu0 0.0
        %325 = vmatpush1.msra.mxu0 0.0
        %326 = vmatprep.subr.mxu0 0.0
        %327 = vmatpush1.msra.mxu0 0.0
        %328 = vmatprep.subr.mxu0 0.0
        %329 = vmatpush1.msra.mxu0 0.0
        %330 = vmatprep.subr.mxu0 0.0
        %331 = vmatpush1.msra.mxu0 0.0
        %332 = vmatprep.subr.mxu0 0.0
        %333 = vmatpush1.msra.mxu0 0.0
        %334 = vmatprep.mubr.f32.mxu0 0.0
        %335 = vmatmul.mubr.f32.gmra.mrb[0].mxu0 %v268
        %v336 = vpop.f32.mrb[0].mxu0
        %v337 = vadd.f32 %v265, %v336
        %v338 = vpop.f32.mrb[0].mxu0
        %339 = vdwg.mxu0
        %v340 = vmax.f32 %v337, 0.0
        %v341 = vsel %vm241, %v340, 0.0
        %342 = vadd.xlane.f32.xlu0 %v341
        %v343 = vpop.xlane.xlu0 %342
        %v344 = vmul.f32 %v343, %v245
        %v345 = vsub.f32 %v340, %v344
        %v346 = vmul.f32 %v345, %v345
        %v347 = vsel %vm241, %v346, 0.0
        %348 = vadd.xlane.f32.xlu0 %v347
        %v349 = vpop.xlane.xlu0 %348
        %v350 = vmul.f32 %v349, %v245
        %v351 = vadd.f32 %v350, 1e-05
        %v352 = vrsqrt.pop %v351
        %v353 = vmul.f32 %v345, %v352
        %v354 = vld [vmem:[%s3] sm:$0xff]
        %v355 = vld [vmem:[%s3 + $0x8] sm:$0xff]
        %v356 = vld [vmem:[%s3 + $0x10] sm:$0xff]
        %v357 = vld [vmem:[%s3 + $0x18] sm:$0xff]
        %v358 = vld [vmem:[%s4] sm:$0x1]
        %v360 = vlaneseq
        %v361 = vshrl.u32 %v360, 7
        %v362 = vsub.s32 0, %v361
        %v363 = vrot.slane %v358, %v362
        %v366 = vsel %vm241, %v353, 0
        %368 = vmatprep.subr.mxu0 0.0
        %369 = vmatpush1.msra.mxu0 %v354
        %370 = vmatprep.subr.mxu0 0.0
        %371 = vmatpush1.msra.mxu0 %v355
        %372 = vmatprep.subr.mxu0 0.0
        %373 = vmatpush1.msra.mxu0 %v356
        %374 = vmatprep.subr.mxu0 0.0
        %375 = vmatpush1.msra.mxu0 %v357
        %376 = vmatprep.subr.mxu0 0.0
        %377 = vmatpush1.msra.mxu0 0.0
        %378 = vmatprep.subr.mxu0 0.0
        %379 = vmatpush1.msra.mxu0 0.0
        %380 = vmatprep.subr.mxu0 0.0
        %381 = vmatpush1.msra.mxu0 0.0
        %382 = vmatprep.subr.mxu0 0.0
        %383 = vmatpush1.msra.mxu0 0.0
        %384 = vmatprep.subr.mxu0 0.0
        %385 = vmatpush1.msra.mxu0 0.0
        %386 = vmatprep.subr.mxu0 0.0
        %387 = vmatpush1.msra.mxu0 0.0
        %388 = vmatprep.subr.mxu0 0.0
        %389 = vmatpush1.msra.mxu0 0.0
        %390 = vmatprep.subr.mxu0 0.0
        %391 = vmatpush1.msra.mxu0 0.0
        %392 = vmatprep.subr.mxu0 0.0
        %393 = vmatpush1.msra.mxu0 0.0
        %394 = vmatprep.subr.mxu0 0.0
        %395 = vmatpush1.msra.mxu0 0.0
        %396 = vmatprep.subr.mxu0 0.0
        %397 = vmatpush1.msra.mxu0 0.0
        %398 = vmatprep.subr.mxu0 0.0
        %399 = vmatpush1.msra.mxu0 0.0
        %400 = vmatprep.subr.mxu0 0.0
        %401 = vmatpush1.msra.mxu0 0.0
        %402 = vmatprep.subr.mxu0 0.0
        %403 = vmatpush1.msra.mxu0 0.0
        %404 = vmatprep.subr.mxu0 0.0
        %405 = vmatpush1.msra.mxu0 0.0
        %406 = vmatprep.subr.mxu0 0.0
        %407 = vmatpush1.msra.mxu0 0.0
        %408 = vmatprep.subr.mxu0 0.0
        %409 = vmatpush1.msra.mxu0 0.0
        %410 = vmatprep.subr.mxu0 0.0
        %411 = vmatpush1.msra.mxu0 0.0
        %412 = vmatprep.subr.mxu0 0.0
        %413 = vmatpush1.msra.mxu0 0.0
        %414 = vmatprep.subr.mxu0 0.0
        %415 = vmatpush1.msra.mxu0 0.0
        %416 = vmatprep.subr.mxu0 0.0
        %417 = vmatpush1.msra.mxu0 0.0
        %418 = vmatprep.subr.mxu0 0.0
        %419 = vmatpush1.msra.mxu0 0.0
        %420 = vmatprep.subr.mxu0 0.0
        %421 = vmatpush1.msra.mxu0 0.0
        %422 = vmatprep.subr.mxu0 0.0
        %423 = vmatpush1.msra.mxu0 0.0
        %424 = vmatprep.subr.mxu0 0.0
        %425 = vmatpush1.msra.mxu0 0.0
        %426 = vmatprep.subr.mxu0 0.0
        %427 = vmatpush1.msra.mxu0 0.0
        %428 = vmatprep.subr.mxu0 0.0
        %429 = vmatpush1.msra.mxu0 0.0
        %430 = vmatprep.subr.mxu0 0.0
        %431 = vmatpush1.msra.mxu0 0.0
        %432 = vmatprep.mubr.f32.mxu0 0.0
        %433 = vmatmul.mubr.f32.gmra.mrb[0].mxu0 %v366
        %v434 = vpop.f32.mrb[0].mxu0
        %v435 = vadd.f32 %v363, %v434
        %v436 = vpop.f32.mrb[0].mxu0
        %437 = vdwg.mxu0
        %vm438 = vcmask 64512
        %439 = vst.msk [vmem:[%s239] sm:$0xff] %vm438, %v435
        %p440 = scmp.lt.s32.totalorder %s19, 1
        %s441 = scalar_select %p440, %s19, 1
        %s442 = smul.addr %s441, 8
        %s443 = scalar_lea.vmem %s5, %s442
        // Predicated region
        $region45: #{tpu_custom_call.1} parent=39 // pred_check
          %p444 = pneg %p147
        $region46: #{tpu_custom_call.1} parent=39 // pred_check_branch
          %446 = sbr.rel (%p444) target = $region48
        $region47: #{tpu_custom_call.1} parent=39 // pred_region
          _
        $region48: #{tpu_custom_call.1} parent=39 // pred_fallthru
          _
      $region40: #{tpu_custom_call.1} parent=5 // pred_fallthru
        _
      %p447 = scmp.le.s32.totalorder 2, %s14
      // Predicated region
      $region49: #{tpu_custom_call.1} parent=5 // pred_check
        %p448 = pneg %p447
      $region50: #{tpu_custom_call.1} parent=5 // pred_check_branch
        %450 = sbr.rel (%p448) target = $region52
      $region51: #{tpu_custom_call.1} parent=5 // pred_region
        %s451 = ssub.s32 %s14, 2
        // Predicated region
        $region53: #{tpu_custom_call.1} parent=51 // pred_check
          %p452 = pneg %p153
        $region54: #{tpu_custom_call.1} parent=51 // pred_check_branch
          %454 = sbr.rel (%p452) target = $region56
        $region55: #{tpu_custom_call.1} parent=51 // pred_region
          %p455 = scmp.lt.s32.totalorder %s20, 1
          %s456 = scalar_select %p455, %s20, 1
          %s457 = smul.addr %s456, 8
          %s458 = scalar_lea.vmem %s5, %s457
        $region56: #{tpu_custom_call.1} parent=51 // pred_fallthru
          _
      $region52: #{tpu_custom_call.1} parent=5 // pred_fallthru
        _
    $region6: #{tpu_custom_call.1} parent=1 // loop_footer
      %s18 = sadd.s32 1, %s14
    $region7: #{tpu_custom_call.1} parent=1 // loop_footer_branch
      %13 = sbr.rel target = $region3
    $region8: #{tpu_custom_call.1} parent=1 // loop_exit
      _
    %459 = vsyncpa [#allocation3], 1
    %s460 = scalar_lea.sflag [#allocation3], 1
    %461 = vsyncpa %s460, 1

</llo_original>
